<compile_context>
chip_gen: v7x
topology: tpu7x:2x2x1
jax: 0.10.0
libtpu: 0.0.40
codegen_flags: <defaults>
</compile_context>

<pallas_src>
import math

import jax
import jax.numpy as jnp
import numpy as np
from jax.experimental import pallas as pl
from jax.experimental.pallas import tpu as pltpu


def _round_up(x, m):
    return ((x + m - 1) // m) * m


def tensor_network_kernel(hi_ref, hj_ref, w3r_ref, vit_ref, vjt_ref, b3_ref,
                          sel_ref, out_ref):
    """One batch tile per grid step; lane-dense operands, 4 MXU chains total.

    hi_ref/hj_ref: (tb, D)    bf16 batch tile of left/right graph embeddings
    w3r_ref:       (D, K*D)   bf16, W3 pre-reshaped: w3r[d, k*D+e] = W3[k, d, e]
    vit_ref:       (D, K)     bf16, V[:, :D].T
    vjt_ref:       (D, K)     bf16, V[:, D:].T
    b3_ref:        (1, K)     f32
    sel_ref:       (K*D, K)   f32 block-diag selector: sel[k*D+e, k'] = 1 if k == k'
    out_ref:       (K, tb)    f32, result stored transposed (lane-dense stores)
    """
    hi = hi_ref[...]                      # (tb, D) bf16 -> MXU input
    hj = hj_ref[...]                      # (tb, D) bf16 -> MXU input
    kd = w3r_ref.shape[1]                 # K*D (static)

    # term_1[b, k] = hi[b] @ W3[k] @ hj[b].T
    # One lane-dense bf16 MXU matmul (f32 accumulation) ...
    hi_w = jnp.dot(hi, w3r_ref[...], preferred_element_type=jnp.float32)   # (tb, K*D) f32

    # ... then replicate hj across the K groups of D lanes (log-doubling concats,
    # all elementwise math in f32), multiply, and reduce per group with a single
    # (tb, K*D) x (K*D, K) selector matmul on the MXU.
    hj_f32 = hj.astype(jnp.float32)
    hj_rep = hj_f32
    while hj_rep.shape[1] * 2 <= kd:
        hj_rep = jnp.concatenate([hj_rep, hj_rep], axis=1)
    if hj_rep.shape[1] < kd:              # handles K not a power of two
        hj_rep = jnp.concatenate([hj_rep, hj_rep[:, : kd - hj_rep.shape[1]]], axis=1)

    term_1 = jnp.dot(hi_w * hj_rep, sel_ref[...],
                     preferred_element_type=jnp.float32)                    # (tb, K) f32

    # term_2 = (V @ [hi, hj].T).T == hi @ V[:, :D].T + hj @ V[:, D:].T
    term_2 = (jnp.dot(hi, vit_ref[...], preferred_element_type=jnp.float32)
              + jnp.dot(hj, vjt_ref[...], preferred_element_type=jnp.float32))  # (tb, K) f32

    scores = jnp.maximum(term_1 + term_2 + b3_ref[...], 0.0)                # (tb, K) f32
    # Lane-dense store: (tb, K) -> (K, tb) on the XLU, then one unmasked vst block.
    out_ref[...] = jnp.transpose(scores).astype(out_ref.dtype)


def prepare_tensor_network_params(W3, V, b3, *, mxu_dtype=jnp.bfloat16):
    """One-time parameter re-layout (hoist out of the per-forward path).

    W3: (K, D, D), V: (K, 2D), b3: (1, K).  Returns lane-dense kernel operands.
    """
    K, D, _ = W3.shape
    w3r = jnp.transpose(jnp.asarray(W3), (1, 0, 2)).reshape(D, K * D).astype(mxu_dtype)
    vi_t = jnp.transpose(jnp.asarray(V)[:, :D]).astype(mxu_dtype)           # (D, K)
    vj_t = jnp.transpose(jnp.asarray(V)[:, D:]).astype(mxu_dtype)           # (D, K)
    b3_f = jnp.asarray(b3, jnp.float32)                                     # (1, K)
    sel = jnp.asarray(np.repeat(np.eye(K, dtype=np.float32), D, axis=0))    # (K*D, K)
    return (w3r, vi_t, vj_t, b3_f, sel)


def tensor_network_forward(params, hi, hj, *, max_rows_per_step=1024,
                           vmem_limit_bytes=None):
    """Batched SimGNN tensor network: hi, hj (B, D) -> scores (B, K).

    Tile guidance: the default (<=1024 rows, multiple of 128) amortises the fixed
    per-grid-step overhead and fits the default scoped-VMEM budget on v5e/v6e/v7x.
    On v6e with very large B, pass max_rows_per_step=4096, vmem_limit_bytes=64<<20;
    keep <=2048 on v7x (64 MiB physical VMEM) and <=1024 on v5e.
    """
    w3r, vi_t, vj_t, b3, sel = params
    B, D = hi.shape
    K = b3.shape[-1]

    # Batch tile rounded to a multiple of 128 rows so the transposed (K, tb)
    # output block is lane-dense and the (8,128) block rule always holds.
    max_rows = max(128, (int(max_rows_per_step) // 128) * 128)
    tb = min(max_rows, _round_up(B, 128))
    n_steps = pl.cdiv(B, tb)
    b_pad = n_steps * tb

    if b_pad != B:
        pad = b_pad - B
        hi = jnp.pad(hi, ((0, pad), (0, 0)))
        hj = jnp.pad(hj, ((0, pad), (0, 0)))
    # bf16 MXU activations (halves the per-step hi/hj DMA); the kernel keeps all
    # accumulation and elementwise math in f32.
    hi = hi.astype(w3r.dtype)
    hj = hj.astype(w3r.dtype)

    grid_spec = pltpu.PrefetchScalarGridSpec(
        num_scalar_prefetch=0,
        grid=(n_steps,),
        in_specs=[
            pl.BlockSpec((tb, D), lambda b: (b, 0)),        # hi tile
            pl.BlockSpec((tb, D), lambda b: (b, 0)),        # hj tile
            pl.BlockSpec((D, K * D), lambda b: (0, 0)),     # W3r (grid-invariant)
            pl.BlockSpec((D, K), lambda b: (0, 0)),         # V_i^T
            pl.BlockSpec((D, K), lambda b: (0, 0)),         # V_j^T
            pl.BlockSpec((1, K), lambda b: (0, 0)),         # b3
            pl.BlockSpec((K * D, K), lambda b: (0, 0)),     # selector
        ],
        # Result stored transposed, (K, tb) blocks -> unmasked lane-dense stores.
        out_specs=pl.BlockSpec((K, tb), lambda b: (0, b)),
    )

    cp_kwargs = dict(dimension_semantics=("parallel",))  # batch tiles independent
    if vmem_limit_bytes is not None:
        cp_kwargs["vmem_limit_bytes"] = int(vmem_limit_bytes)

    out_t = pl.pallas_call(
        tensor_network_kernel,
        out_shape=jax.ShapeDtypeStruct((K, b_pad), jnp.float32),
        grid_spec=grid_spec,
        compiler_params=pltpu.CompilerParams(**cp_kwargs),
    )(hi, hj, w3r, vi_t, vj_t, b3, sel)

    # Padded batch rows evaluate to relu(b3) and are dropped here; do NOT reduce
    # over them if this slice is ever removed during a later fusion.
    return jnp.transpose(out_t[:, :B])


def tensor_network_module(hi, hj, W3, V, b3, **kwargs):
    """Drop-in, single-shot call matching the torch module (B == 1 per pair).
    For repeated calls, hoist prepare_tensor_network_params() out of the loop."""
    return tensor_network_forward(prepare_tensor_network_params(W3, V, b3),
                                  hi, hj, **kwargs)


def _xavier_uniform(key, shape):
    # Mirrors torch.nn.init.xavier_uniform_ fan computation.
    if len(shape) == 2:
        fan_in, fan_out = shape[1], shape[0]
    else:
        receptive = int(np.prod(shape[2:]))
        fan_in, fan_out = shape[1] * receptive, shape[0] * receptive
    bound = math.sqrt(6.0 / (fan_in + fan_out))
    return jax.random.uniform(key, shape, jnp.float32, -bound, bound)


def _reference(hi, hj, W3, V, b3):
    D = hi.shape[1]
    term_1 = jnp.einsum("bd,kde,be->bk", hi, W3, hj)            # (B, K)
    term_2 = hi @ V[:, :D].T + hj @ V[:, D:].T                  # (B, K)
    return jax.nn.relu(term_1 + term_2 + b3)


if __name__ == "__main__":
    config = {"filters_3": 32, "tensor_neurons": 16}
    D = config["filters_3"]
    K = config["tensor_neurons"]
    B = 8  # batch of graph pairs (original module == B = 1)

    key = jax.random.PRNGKey(0)
    k_w3, k_v, k_b3, k_hi, k_hj = jax.random.split(key, 5)

    W3 = _xavier_uniform(k_w3, (K, D, D))
    V = _xavier_uniform(k_v, (K, 2 * D))
    b3 = _xavier_uniform(k_b3, (1, K))

    hi = jax.random.normal(k_hi, (B, D), jnp.float32)
    hj = jax.random.normal(k_hj, (B, D), jnp.float32)

    # One-time parameter preparation, then a jitted batched forward.
    params = prepare_tensor_network_params(W3, V, b3)
    fwd = jax.jit(tensor_network_forward)

    scores = fwd(params, hi, hj)
    jax.block_until_ready(scores)
    ref = _reference(hi, hj, W3, V, b3)
    # bf16 MXU operands (f32 accumulation) -> slightly loosened tolerance.
    np.testing.assert_allclose(np.asarray(scores), np.asarray(ref),
                               rtol=2e-2, atol=2e-2)

    # Single-pair call, exactly the original torch module's signature (1, D).
    s1 = tensor_network_module(hi[:1], hj[:1], W3, V, b3)
    jax.block_until_ready(s1)
    np.testing.assert_allclose(np.asarray(s1), np.asarray(ref[:1]),
                               rtol=2e-2, atol=2e-2)

    print("KERNEL_OK")
</pallas_src>

<mosaic_0001>
module attributes {stable_mosaic.version = 11 : i64} {
  func.func @tensor_network_kernel(%arg0: i32, %arg1: memref<128x32xbf16, #tpu.memory_space<vmem>>, %arg2: memref<128x32xbf16, #tpu.memory_space<vmem>>, %arg3: memref<32x512xbf16, #tpu.memory_space<vmem>>, %arg4: memref<32x16xbf16, #tpu.memory_space<vmem>>, %arg5: memref<32x16xbf16, #tpu.memory_space<vmem>>, %arg6: memref<1x16xf32, #tpu.memory_space<vmem>>, %arg7: memref<512x16xf32, #tpu.memory_space<vmem>>, %arg8: memref<16x128xf32, #tpu.memory_space<vmem>>) attributes {dimension_semantics = [#tpu.dimension_semantics<parallel>], iteration_bounds = array<i64: 1>, scalar_prefetch = 0 : i64, scratch_operands = 0 : i64, tpu.core_type = #tpu.core_type<tc>, window_params = [{transform_indices = @transform_0, window_bounds = array<i64: 128, 32>}, {transform_indices = @transform_1, window_bounds = array<i64: 128, 32>}, {pipeline_mode = #tpu.pipeline_mode<synchronous>, transform_indices = @transform_2, window_bounds = array<i64: 32, 512>}, {pipeline_mode = #tpu.pipeline_mode<synchronous>, transform_indices = @transform_3, window_bounds = array<i64: 32, 16>}, {pipeline_mode = #tpu.pipeline_mode<synchronous>, transform_indices = @transform_4, window_bounds = array<i64: 32, 16>}, {pipeline_mode = #tpu.pipeline_mode<synchronous>, transform_indices = @transform_5, window_bounds = array<i64: 1, 16>}, {pipeline_mode = #tpu.pipeline_mode<synchronous>, transform_indices = @transform_6, window_bounds = array<i64: 512, 16>}, {transform_indices = @transform_7, window_bounds = array<i64: 16, 128>}]} {
    %c0 = arith.constant 0 : index
    %c0_0 = arith.constant 0 : index
    %0 = vector.load %arg1[%c0, %c0_0] : memref<128x32xbf16, #tpu.memory_space<vmem>>, vector<128x32xbf16>
    %c0_1 = arith.constant 0 : index
    %c0_2 = arith.constant 0 : index
    %1 = vector.load %arg2[%c0_1, %c0_2] : memref<128x32xbf16, #tpu.memory_space<vmem>>, vector<128x32xbf16>
    %c0_3 = arith.constant 0 : index
    %c0_4 = arith.constant 0 : index
    %2 = vector.load %arg3[%c0_3, %c0_4] : memref<32x512xbf16, #tpu.memory_space<vmem>>, vector<32x512xbf16>
    %cst = arith.constant dense<0.000000e+00> : vector<128x512xf32>
    %3 = tpu.matmul %0, %2, %cst {dimension_numbers = #tpu.dot_dimension_numbers<[1], [0], [0], [1], [0, 0, 1, 1], [], []>} : vector<128x32xbf16>, vector<32x512xbf16>, vector<128x512xf32> -> vector<128x512xf32>
    %4 = arith.extf %1 : vector<128x32xbf16> to vector<128x32xf32>
    %5 = tpu.concatenate %4, %4 in 1 : vector<128x32xf32>, vector<128x32xf32> -> vector<128x64xf32>
    %6 = tpu.concatenate %5, %5 in 1 : vector<128x64xf32>, vector<128x64xf32> -> vector<128x128xf32>
    %7 = tpu.concatenate %6, %6 in 1 : vector<128x128xf32>, vector<128x128xf32> -> vector<128x256xf32>
    %8 = tpu.concatenate %7, %7 in 1 : vector<128x256xf32>, vector<128x256xf32> -> vector<128x512xf32>
    %9 = arith.mulf %3, %8 : vector<128x512xf32>
    %c0_5 = arith.constant 0 : index
    %c0_6 = arith.constant 0 : index
    %10 = vector.load %arg7[%c0_5, %c0_6] : memref<512x16xf32, #tpu.memory_space<vmem>>, vector<512x16xf32>
    %cst_7 = arith.constant dense<0.000000e+00> : vector<128x16xf32>
    %11 = tpu.matmul %9, %10, %cst_7 {dimension_numbers = #tpu.dot_dimension_numbers<[1], [0], [0], [1], [0, 0, 1, 1], [], []>} : vector<128x512xf32>, vector<512x16xf32>, vector<128x16xf32> -> vector<128x16xf32>
    %c0_8 = arith.constant 0 : index
    %c0_9 = arith.constant 0 : index
    %12 = vector.load %arg4[%c0_8, %c0_9] : memref<32x16xbf16, #tpu.memory_space<vmem>>, vector<32x16xbf16>
    %cst_10 = arith.constant dense<0.000000e+00> : vector<128x16xf32>
    %13 = tpu.matmul %0, %12, %cst_10 {dimension_numbers = #tpu.dot_dimension_numbers<[1], [0], [0], [1], [0, 0, 1, 1], [], []>} : vector<128x32xbf16>, vector<32x16xbf16>, vector<128x16xf32> -> vector<128x16xf32>
    %c0_11 = arith.constant 0 : index
    %c0_12 = arith.constant 0 : index
    %14 = vector.load %arg5[%c0_11, %c0_12] : memref<32x16xbf16, #tpu.memory_space<vmem>>, vector<32x16xbf16>
    %cst_13 = arith.constant dense<0.000000e+00> : vector<128x16xf32>
    %15 = tpu.matmul %1, %14, %cst_13 {dimension_numbers = #tpu.dot_dimension_numbers<[1], [0], [0], [1], [0, 0, 1, 1], [], []>} : vector<128x32xbf16>, vector<32x16xbf16>, vector<128x16xf32> -> vector<128x16xf32>
    %16 = arith.addf %13, %15 : vector<128x16xf32>
    %17 = arith.addf %11, %16 : vector<128x16xf32>
    %c0_14 = arith.constant 0 : index
    %c0_15 = arith.constant 0 : index
    %18 = vector.load %arg6[%c0_14, %c0_15] : memref<1x16xf32, #tpu.memory_space<vmem>>, vector<1x16xf32>
    %19 = vector.broadcast %18 : vector<1x16xf32> to vector<128x16xf32>
    %20 = arith.addf %17, %19 : vector<128x16xf32>
    %cst_16 = arith.constant 0.000000e+00 : f32
    %21 = vector.broadcast %cst_16 : f32 to vector<128x16xf32>
    %22 = arith.maximumf %20, %21 : vector<128x16xf32>
    %23 = tpu.transpose %22, [1, 0] : vector<128x16xf32> -> vector<16x128xf32>
    %c0_17 = arith.constant 0 : index
    %c0_18 = arith.constant 0 : index
    %24 = vector.load %arg8[%c0_17, %c0_18] : memref<16x128xf32, #tpu.memory_space<vmem>>, vector<16x128xf32>
    tpu.vector_store %arg8[%c0_17, %c0_18], %23 {strides = array<i32>} : memref<16x128xf32, #tpu.memory_space<vmem>>, vector<16x128xf32>,
    return
  }
  func.func @transform_0(%arg0: i32) -> (i32, i32) {
    %c0_i32 = arith.constant 0 : i32
    %c0_i32_0 = arith.constant 0 : i32
    return %arg0, %c0_i32 : i32, i32
  }
  func.func @transform_1(%arg0: i32) -> (i32, i32) {
    %c0_i32 = arith.constant 0 : i32
    %c0_i32_0 = arith.constant 0 : i32
    return %arg0, %c0_i32 : i32, i32
  }
  func.func @transform_2(%arg0: i32) -> (i32, i32) {
    %c0_i32 = arith.constant 0 : i32
    %c0_i32_0 = arith.constant 0 : i32
    %c0_i32_1 = arith.constant 0 : i32
    return %c0_i32, %c0_i32_0 : i32, i32
  }
  func.func @transform_3(%arg0: i32) -> (i32, i32) {
    %c0_i32 = arith.constant 0 : i32
    %c0_i32_0 = arith.constant 0 : i32
    %c0_i32_1 = arith.constant 0 : i32
    return %c0_i32, %c0_i32_0 : i32, i32
  }
  func.func @transform_4(%arg0: i32) -> (i32, i32) {
    %c0_i32 = arith.constant 0 : i32
    %c0_i32_0 = arith.constant 0 : i32
    %c0_i32_1 = arith.constant 0 : i32
    return %c0_i32, %c0_i32_0 : i32, i32
  }
  func.func @transform_5(%arg0: i32) -> (i32, i32) {
    %c0_i32 = arith.constant 0 : i32
    %c0_i32_0 = arith.constant 0 : i32
    %c0_i32_1 = arith.constant 0 : i32
    return %c0_i32, %c0_i32_0 : i32, i32
  }
  func.func @transform_6(%arg0: i32) -> (i32, i32) {
    %c0_i32 = arith.constant 0 : i32
    %c0_i32_0 = arith.constant 0 : i32
    %c0_i32_1 = arith.constant 0 : i32
    return %c0_i32, %c0_i32_0 : i32, i32
  }
  func.func @transform_7(%arg0: i32) -> (i32, i32) {
    %c0_i32 = arith.constant 0 : i32
    %c0_i32_0 = arith.constant 0 : i32
    return %c0_i32, %arg0 : i32, i32
  }
}

</mosaic_0001>

<llo_original>
// kernel: tensor_network_forward.1
$region0: #{tensor_network_forward.1}
  #allocation0 [shape = 'u32[]', space=smem, size = 0x4, offset = 0x4, fixed_abs, tag = 'smem constant byte address 0x4 - core index']
  #allocation1 [shape = 'u32[144,128]{1,0:T(1,128)}', space=vmem, size = 0x12000, scoped, tag = 'internal scratch']
  %s0 = inlined_call_operand.vmem [shape: bf16[128,32], index: 0, kind: input, shape index: {}]
  %s1 = inlined_call_operand.vmem [shape: bf16[128,32], index: 1, kind: input, shape index: {}]
  %s2 = inlined_call_operand.vmem [shape: bf16[32,512], index: 2, kind: input, shape index: {}]
  %s3 = inlined_call_operand.vmem [shape: bf16[32,16], index: 3, kind: input, shape index: {}]
  %s4 = inlined_call_operand.vmem [shape: bf16[32,16], index: 4, kind: input, shape index: {}]
  %s5 = inlined_call_operand.vmem [shape: f32[1,16], index: 5, kind: input, shape index: {}]
  %s6 = inlined_call_operand.vmem [shape: f32[512,16], index: 6, kind: input, shape index: {}]
  %s7 = inlined_call_operand.vmem [shape: f32[16,128], index: 7, kind: output, shape index: {}]
  %s8 = sld [smem:[#allocation0]]
  $region38: #{tensor_network_forward.1} parent=0
    _
  %s10 = ssub.s32 1, %s8
  %s11 = scalar_select 0, %s10, %s8
  // Predicated region
  $region2: #{tensor_network_forward.1} parent=0 // pred_check
    _
  $region3: #{tensor_network_forward.1} parent=0 // pred_check_branch
    %13 = sbr.rel (0) target = $region5
  $region4: #{tensor_network_forward.1} parent=0 // pred_region
    _
  $region5: #{tensor_network_forward.1} parent=0 // pred_fallthru
    _
  // Predicated region
  $region6: #{tensor_network_forward.1} parent=0 // pred_check
    _
  $region7: #{tensor_network_forward.1} parent=0 // pred_check_branch
    %15 = sbr.rel (0) target = $region9
  $region8: #{tensor_network_forward.1} parent=0 // pred_region
    _
  $region9: #{tensor_network_forward.1} parent=0 // pred_fallthru
    _
  // Predicated region
  $region10: #{tensor_network_forward.1} parent=0 // pred_check
    _
  $region11: #{tensor_network_forward.1} parent=0 // pred_check_branch
    %17 = sbr.rel (0) target = $region13
  $region12: #{tensor_network_forward.1} parent=0 // pred_region
    _
  $region13: #{tensor_network_forward.1} parent=0 // pred_fallthru
    _
  // Predicated region
  $region14: #{tensor_network_forward.1} parent=0 // pred_check
    _
  $region15: #{tensor_network_forward.1} parent=0 // pred_check_branch
    %19 = sbr.rel (0) target = $region17
  $region16: #{tensor_network_forward.1} parent=0 // pred_region
    _
  $region17: #{tensor_network_forward.1} parent=0 // pred_fallthru
    _
  // Predicated region
  $region18: #{tensor_network_forward.1} parent=0 // pred_check
    _
  $region19: #{tensor_network_forward.1} parent=0 // pred_check_branch
    %21 = sbr.rel (0) target = $region21
  $region20: #{tensor_network_forward.1} parent=0 // pred_region
    _
  $region21: #{tensor_network_forward.1} parent=0 // pred_fallthru
    _
  // Predicated region
  $region22: #{tensor_network_forward.1} parent=0 // pred_check
    _
  $region23: #{tensor_network_forward.1} parent=0 // pred_check_branch
    %23 = sbr.rel (0) target = $region25
  $region24: #{tensor_network_forward.1} parent=0 // pred_region
    _
  $region25: #{tensor_network_forward.1} parent=0 // pred_fallthru
    _
  // Predicated region
  $region26: #{tensor_network_forward.1} parent=0 // pred_check
    _
  $region27: #{tensor_network_forward.1} parent=0 // pred_check_branch
    %25 = sbr.rel (0) target = $region29
  $region28: #{tensor_network_forward.1} parent=0 // pred_region
    _
  $region29: #{tensor_network_forward.1} parent=0 // pred_fallthru
    _
  %v27 = vld [vmem:[%s0] sm:$0xf]
  %v28 = vld [vmem:[%s0 + $0x4] sm:$0xf]
  %v29 = vld [vmem:[%s0 + $0x8] sm:$0xf]
  %v30 = vld [vmem:[%s0 + $0xc] sm:$0xf]
  %v31 = vld [vmem:[%s0 + $0x10] sm:$0xf]
  %v32 = vld [vmem:[%s0 + $0x14] sm:$0xf]
  %v33 = vld [vmem:[%s0 + $0x18] sm:$0xf]
  %v34 = vld [vmem:[%s0 + $0x1c] sm:$0xf]
  %v35 = vld [vmem:[%s0 + $0x20] sm:$0xf]
  %v36 = vld [vmem:[%s0 + $0x24] sm:$0xf]
  %v37 = vld [vmem:[%s0 + $0x28] sm:$0xf]
  %v38 = vld [vmem:[%s0 + $0x2c] sm:$0xf]
  %v39 = vld [vmem:[%s0 + $0x30] sm:$0xf]
  %v40 = vld [vmem:[%s0 + $0x34] sm:$0xf]
  %v41 = vld [vmem:[%s0 + $0x38] sm:$0xf]
  %v42 = vld [vmem:[%s0 + $0x3c] sm:$0xf]
  %v43 = vld [vmem:[%s1] sm:$0xf]
  %v44 = vld [vmem:[%s1 + $0x4] sm:$0xf]
  %v45 = vld [vmem:[%s1 + $0x8] sm:$0xf]
  %v46 = vld [vmem:[%s1 + $0xc] sm:$0xf]
  %v47 = vld [vmem:[%s1 + $0x10] sm:$0xf]
  %v48 = vld [vmem:[%s1 + $0x14] sm:$0xf]
  %v49 = vld [vmem:[%s1 + $0x18] sm:$0xf]
  %v50 = vld [vmem:[%s1 + $0x1c] sm:$0xf]
  %v51 = vld [vmem:[%s1 + $0x20] sm:$0xf]
  %v52 = vld [vmem:[%s1 + $0x24] sm:$0xf]
  %v53 = vld [vmem:[%s1 + $0x28] sm:$0xf]
  %v54 = vld [vmem:[%s1 + $0x2c] sm:$0xf]
  %v55 = vld [vmem:[%s1 + $0x30] sm:$0xf]
  %v56 = vld [vmem:[%s1 + $0x34] sm:$0xf]
  %v57 = vld [vmem:[%s1 + $0x38] sm:$0xf]
  %v58 = vld [vmem:[%s1 + $0x3c] sm:$0xf]
  %v59 = vld [vmem:[%s2] sm:$0xff]
  %v60 = vld [vmem:[%s2 + $0x8] sm:$0xff]
  %v61 = vld [vmem:[%s2 + $0x10] sm:$0xff]
  %v62 = vld [vmem:[%s2 + $0x18] sm:$0xff]
  %v63 = vld [vmem:[%s2 + $0x20] sm:$0xff]
  %v64 = vld [vmem:[%s2 + $0x28] sm:$0xff]
  %v65 = vld [vmem:[%s2 + $0x30] sm:$0xff]
  %v66 = vld [vmem:[%s2 + $0x38] sm:$0xff]
  %v83 = vunpack.c.l.b16 %v27
  %v84 = vunpack.c.l.b16 %v28
  %v85 = vunpack.c.l.b16 %v29
  %v86 = vunpack.c.l.b16 %v30
  %v87 = vunpack.c.l.b16 %v31
  %v88 = vunpack.c.l.b16 %v32
  %v89 = vunpack.c.l.b16 %v33
  %v90 = vunpack.c.l.b16 %v34
  %v91 = vunpack.c.l.b16 %v35
  %v92 = vunpack.c.l.b16 %v36
  %v93 = vunpack.c.l.b16 %v37
  %v94 = vunpack.c.l.b16 %v38
  %v95 = vunpack.c.l.b16 %v39
  %v96 = vunpack.c.l.b16 %v40
  %v97 = vunpack.c.l.b16 %v41
  %v98 = vunpack.c.l.b16 %v42
  %v99 = vpack.c.b16 %v84, %v83
  %v100 = vpack.c.b16 %v86, %v85
  %v101 = vpack.c.b16 %v88, %v87
  %v102 = vpack.c.b16 %v90, %v89
  %v103 = vpack.c.b16 %v92, %v91
  %v104 = vpack.c.b16 %v94, %v93
  %v105 = vpack.c.b16 %v96, %v95
  %v106 = vpack.c.b16 %v98, %v97
  %v115 = vunpack.c.l.b16 %v59
  %v116 = vunpack.c.h.b16 %v59
  %v117 = vunpack.c.l.b16 %v60
  %v118 = vunpack.c.h.b16 %v60
  %v119 = vunpack.c.l.b16 %v61
  %v120 = vunpack.c.h.b16 %v61
  %v121 = vunpack.c.l.b16 %v62
  %v122 = vunpack.c.h.b16 %v62
  %v123 = vunpack.c.l.b16 %v63
  %v124 = vunpack.c.h.b16 %v63
  %v125 = vunpack.c.l.b16 %v64
  %v126 = vunpack.c.h.b16 %v64
  %v127 = vunpack.c.l.b16 %v65
  %v128 = vunpack.c.h.b16 %v65
  %v129 = vunpack.c.l.b16 %v66
  %v130 = vunpack.c.h.b16 %v66
  %v131 = vpack.c.b16 %v119, %v115
  %v132 = vpack.c.b16 %v120, %v116
  %v133 = vpack.c.b16 %v121, %v117
  %v134 = vpack.c.b16 %v122, %v118
  %v135 = vpack.c.b16 %v127, %v123
  %v136 = vpack.c.b16 %v128, %v124
  %v137 = vpack.c.b16 %v129, %v125
  %v138 = vpack.c.b16 %v130, %v126
  %vm147 = vcmask 261120
  %v149 = vsel %vm147, %v99, 0
  %v152 = vsel %vm147, %v100, 0
  %v155 = vsel %vm147, %v101, 0
  %v158 = vsel %vm147, %v102, 0
  %v161 = vsel %vm147, %v103, 0
  %v164 = vsel %vm147, %v104, 0
  %v167 = vsel %vm147, %v105, 0
  %v170 = vsel %vm147, %v106, 0
  %172 = vmatprep.subr.bf16.mxu0 %v132
  %173 = vmatpush1.bf16.msra.mxu0 %v131
  %174 = vmatprep.subr.bf16.mxu0 %v136
  %175 = vmatpush1.bf16.msra.mxu0 %v135
  %176 = vmatprep.subr.bf16.mxu0 0
  %177 = vmatpush1.bf16.msra.mxu0 0
  %178 = vmatprep.subr.bf16.mxu0 0
  %179 = vmatpush1.bf16.msra.mxu0 0
  %180 = vmatprep.subr.bf16.mxu0 0
  %181 = vmatpush1.bf16.msra.mxu0 0
  %182 = vmatprep.subr.bf16.mxu0 0
  %183 = vmatpush1.bf16.msra.mxu0 0
  %184 = vmatprep.subr.bf16.mxu0 0
  %185 = vmatpush1.bf16.msra.mxu0 0
  %186 = vmatprep.subr.bf16.mxu0 0
  %187 = vmatpush1.bf16.msra.mxu0 0
  %188 = vmatprep.subr.bf16.mxu0 0
  %189 = vmatpush1.bf16.msra.mxu0 0
  %190 = vmatprep.subr.bf16.mxu0 0
  %191 = vmatpush1.bf16.msra.mxu0 0
  %192 = vmatprep.subr.bf16.mxu0 0
  %193 = vmatpush1.bf16.msra.mxu0 0
  %194 = vmatprep.subr.bf16.mxu0 0
  %195 = vmatpush1.bf16.msra.mxu0 0
  %196 = vmatprep.subr.bf16.mxu0 0
  %197 = vmatpush1.bf16.msra.mxu0 0
  %198 = vmatprep.subr.bf16.mxu0 0
  %199 = vmatpush1.bf16.msra.mxu0 0
  %200 = vmatprep.subr.bf16.mxu0 0
  %201 = vmatpush1.bf16.msra.mxu0 0
  %202 = vmatprep.subr.bf16.mxu0 0
  %203 = vmatpush1.bf16.msra.mxu0 0
  %204 = vmatprep.mubr.bf16.mxu0 0
  %205 = vmatmul.mubr.bf16.gmra.mrb[0].mxu0 %v149
  %v206 = vpop.f32.mrb[0].mxu0
  %v207 = vadd.f32 0.0, %v206
  %v208 = vpop.f32.mrb[0].mxu0
  %v209 = vadd.f32 0.0, %v208
  %v210 = vpop.f32.mrb[0].mxu0
  %v211 = vadd.f32 0.0, %v210
  %v212 = vpop.f32.mrb[0].mxu0
  %v213 = vadd.f32 0.0, %v212
  %214 = vmatprep.mubr.bf16.mxu0 0
  %215 = vmatmul.mubr.bf16.gmra.mrb[0].mxu0 %v152
  %v216 = vpop.f32.mrb[0].mxu0
  %v217 = vadd.f32 0.0, %v216
  %v218 = vpop.f32.mrb[0].mxu0
  %v219 = vadd.f32 0.0, %v218
  %v220 = vpop.f32.mrb[0].mxu0
  %v221 = vadd.f32 0.0, %v220
  %v222 = vpop.f32.mrb[0].mxu0
  %v223 = vadd.f32 0.0, %v222
  %224 = vmatprep.mubr.bf16.mxu0 0
  %225 = vmatmul.mubr.bf16.gmra.mrb[0].mxu0 %v155
  %v226 = vpop.f32.mrb[0].mxu0
  %v227 = vadd.f32 0.0, %v226
  %v228 = vpop.f32.mrb[0].mxu0
  %v229 = vadd.f32 0.0, %v228
  %v230 = vpop.f32.mrb[0].mxu0
  %v231 = vadd.f32 0.0, %v230
  %v232 = vpop.f32.mrb[0].mxu0
  %v233 = vadd.f32 0.0, %v232
  %234 = vmatprep.mubr.bf16.mxu0 0
  %235 = vmatmul.mubr.bf16.gmra.mrb[0].mxu0 %v158
  %v236 = vpop.f32.mrb[0].mxu0
  %v237 = vadd.f32 0.0, %v236
  %v238 = vpop.f32.mrb[0].mxu0
  %v239 = vadd.f32 0.0, %v238
  %v240 = vpop.f32.mrb[0].mxu0
  %v241 = vadd.f32 0.0, %v240
  %v242 = vpop.f32.mrb[0].mxu0
  %v243 = vadd.f32 0.0, %v242
  %244 = vmatprep.mubr.bf16.mxu0 0
  %245 = vmatmul.mubr.bf16.gmra.mrb[0].mxu0 %v161
  %v246 = vpop.f32.mrb[0].mxu0
  %v247 = vadd.f32 0.0, %v246
  %v248 = vpop.f32.mrb[0].mxu0
  %v249 = vadd.f32 0.0, %v248
  %v250 = vpop.f32.mrb[0].mxu0
  %v251 = vadd.f32 0.0, %v250
  %v252 = vpop.f32.mrb[0].mxu0
  %v253 = vadd.f32 0.0, %v252
  %254 = vmatprep.mubr.bf16.mxu0 0
  %255 = vmatmul.mubr.bf16.gmra.mrb[0].mxu0 %v164
  %v256 = vpop.f32.mrb[0].mxu0
  %v257 = vadd.f32 0.0, %v256
  %v258 = vpop.f32.mrb[0].mxu0
  %v259 = vadd.f32 0.0, %v258
  %v260 = vpop.f32.mrb[0].mxu0
  %v261 = vadd.f32 0.0, %v260
  %v262 = vpop.f32.mrb[0].mxu0
  %v263 = vadd.f32 0.0, %v262
  %264 = vmatprep.mubr.bf16.mxu0 0
  %265 = vmatmul.mubr.bf16.gmra.mrb[0].mxu0 %v167
  %v266 = vpop.f32.mrb[0].mxu0
  %v267 = vadd.f32 0.0, %v266
  %v268 = vpop.f32.mrb[0].mxu0
  %v269 = vadd.f32 0.0, %v268
  %v270 = vpop.f32.mrb[0].mxu0
  %v271 = vadd.f32 0.0, %v270
  %v272 = vpop.f32.mrb[0].mxu0
  %v273 = vadd.f32 0.0, %v272
  %274 = vmatprep.mubr.bf16.mxu0 0
  %275 = vmatmul.mubr.bf16.gmra.mrb[0].mxu0 %v170
  %v276 = vpop.f32.mrb[0].mxu0
  %v277 = vadd.f32 0.0, %v276
  %v278 = vpop.f32.mrb[0].mxu0
  %v279 = vadd.f32 0.0, %v278
  %v280 = vpop.f32.mrb[0].mxu0
  %v281 = vadd.f32 0.0, %v280
  %v282 = vpop.f32.mrb[0].mxu0
  %v283 = vadd.f32 0.0, %v282
  %284 = vdwg.mxu0
  %285 = vmatprep.subr.bf16.mxu0 %v134
  %286 = vmatpush1.bf16.msra.mxu0 %v133
  %287 = vmatprep.subr.bf16.mxu0 %v138
  %288 = vmatpush1.bf16.msra.mxu0 %v137
  %289 = vmatprep.subr.bf16.mxu0 0
  %290 = vmatpush1.bf16.msra.mxu0 0
  %291 = vmatprep.subr.bf16.mxu0 0
  %292 = vmatpush1.bf16.msra.mxu0 0
  %293 = vmatprep.subr.bf16.mxu0 0
  %294 = vmatpush1.bf16.msra.mxu0 0
  %295 = vmatprep.subr.bf16.mxu0 0
  %296 = vmatpush1.bf16.msra.mxu0 0
  %297 = vmatprep.subr.bf16.mxu0 0
  %298 = vmatpush1.bf16.msra.mxu0 0
  %299 = vmatprep.subr.bf16.mxu0 0
  %300 = vmatpush1.bf16.msra.mxu0 0
  %301 = vmatprep.subr.bf16.mxu0 0
  %302 = vmatpush1.bf16.msra.mxu0 0
  %303 = vmatprep.subr.bf16.mxu0 0
  %304 = vmatpush1.bf16.msra.mxu0 0
  %305 = vmatprep.subr.bf16.mxu0 0
  %306 = vmatpush1.bf16.msra.mxu0 0
  %307 = vmatprep.subr.bf16.mxu0 0
  %308 = vmatpush1.bf16.msra.mxu0 0
  %309 = vmatprep.subr.bf16.mxu0 0
  %310 = vmatpush1.bf16.msra.mxu0 0
  %311 = vmatprep.subr.bf16.mxu0 0
  %312 = vmatpush1.bf16.msra.mxu0 0
  %313 = vmatprep.subr.bf16.mxu0 0
  %314 = vmatpush1.bf16.msra.mxu0 0
  %315 = vmatprep.subr.bf16.mxu0 0
  %316 = vmatpush1.bf16.msra.mxu0 0
  %317 = vmatprep.mubr.bf16.mxu0 0
  %318 = vmatmul.mubr.bf16.gmra.mrb[0].mxu0 %v149
  %v319 = vpop.f32.mrb[0].mxu0
  %v320 = vadd.f32 0.0, %v319
  %v321 = vpop.f32.mrb[0].mxu0
  %v322 = vadd.f32 0.0, %v321
  %v323 = vpop.f32.mrb[0].mxu0
  %v324 = vadd.f32 0.0, %v323
  %v325 = vpop.f32.mrb[0].mxu0
  %v326 = vadd.f32 0.0, %v325
  %327 = vmatprep.mubr.bf16.mxu0 0
  %328 = vmatmul.mubr.bf16.gmra.mrb[0].mxu0 %v152
  %v329 = vpop.f32.mrb[0].mxu0
  %v330 = vadd.f32 0.0, %v329
  %v331 = vpop.f32.mrb[0].mxu0
  %v332 = vadd.f32 0.0, %v331
  %v333 = vpop.f32.mrb[0].mxu0
  %v334 = vadd.f32 0.0, %v333
  %v335 = vpop.f32.mrb[0].mxu0
  %v336 = vadd.f32 0.0, %v335
  %337 = vmatprep.mubr.bf16.mxu0 0
  %338 = vmatmul.mubr.bf16.gmra.mrb[0].mxu0 %v155
  %v339 = vpop.f32.mrb[0].mxu0
  %v340 = vadd.f32 0.0, %v339
  %v341 = vpop.f32.mrb[0].mxu0
  %v342 = vadd.f32 0.0, %v341
  %v343 = vpop.f32.mrb[0].mxu0
  %v344 = vadd.f32 0.0, %v343
  %v345 = vpop.f32.mrb[0].mxu0
  %v346 = vadd.f32 0.0, %v345
  %347 = vmatprep.mubr.bf16.mxu0 0
  %348 = vmatmul.mubr.bf16.gmra.mrb[0].mxu0 %v158
  %v349 = vpop.f32.mrb[0].mxu0
  %v350 = vadd.f32 0.0, %v349
  %v351 = vpop.f32.mrb[0].mxu0
  %v352 = vadd.f32 0.0, %v351
  %v353 = vpop.f32.mrb[0].mxu0
  %v354 = vadd.f32 0.0, %v353
  %v355 = vpop.f32.mrb[0].mxu0
  %v356 = vadd.f32 0.0, %v355
  %357 = vmatprep.mubr.bf16.mxu0 0
  %358 = vmatmul.mubr.bf16.gmra.mrb[0].mxu0 %v161
  %v359 = vpop.f32.mrb[0].mxu0
  %v360 = vadd.f32 0.0, %v359
  %v361 = vpop.f32.mrb[0].mxu0
  %v362 = vadd.f32 0.0, %v361
  %v363 = vpop.f32.mrb[0].mxu0
  %v364 = vadd.f32 0.0, %v363
  %v365 = vpop.f32.mrb[0].mxu0
  %v366 = vadd.f32 0.0, %v365
  %367 = vmatprep.mubr.bf16.mxu0 0
  %368 = vmatmul.mubr.bf16.gmra.mrb[0].mxu0 %v164
  %v369 = vpop.f32.mrb[0].mxu0
  %v370 = vadd.f32 0.0, %v369
  %v371 = vpop.f32.mrb[0].mxu0
  %v372 = vadd.f32 0.0, %v371
  %v373 = vpop.f32.mrb[0].mxu0
  %v374 = vadd.f32 0.0, %v373
  %v375 = vpop.f32.mrb[0].mxu0
  %v376 = vadd.f32 0.0, %v375
  %377 = vmatprep.mubr.bf16.mxu0 0
  %378 = vmatmul.mubr.bf16.gmra.mrb[0].mxu0 %v167
  %v379 = vpop.f32.mrb[0].mxu0
  %v380 = vadd.f32 0.0, %v379
  %v381 = vpop.f32.mrb[0].mxu0
  %v382 = vadd.f32 0.0, %v381
  %v383 = vpop.f32.mrb[0].mxu0
  %v384 = vadd.f32 0.0, %v383
  %v385 = vpop.f32.mrb[0].mxu0
  %v386 = vadd.f32 0.0, %v385
  %387 = vmatprep.mubr.bf16.mxu0 0
  %388 = vmatmul.mubr.bf16.gmra.mrb[0].mxu0 %v170
  %v389 = vpop.f32.mrb[0].mxu0
  %v390 = vadd.f32 0.0, %v389
  %v391 = vpop.f32.mrb[0].mxu0
  %v392 = vadd.f32 0.0, %v391
  %v393 = vpop.f32.mrb[0].mxu0
  %v394 = vadd.f32 0.0, %v393
  %v395 = vpop.f32.mrb[0].mxu0
  %v396 = vadd.f32 0.0, %v395
  %397 = vdwg.mxu0
  %v398 = vunpack.c.l.bf16 %v43
  %v399 = vunpack.c.l.bf16 %v44
  %v400 = vunpack.c.l.bf16 %v45
  %v401 = vunpack.c.l.bf16 %v46
  %v402 = vunpack.c.l.bf16 %v47
  %v403 = vunpack.c.l.bf16 %v48
  %v404 = vunpack.c.l.bf16 %v49
  %v405 = vunpack.c.l.bf16 %v50
  %v406 = vunpack.c.l.bf16 %v51
  %v407 = vunpack.c.l.bf16 %v52
  %v408 = vunpack.c.l.bf16 %v53
  %v409 = vunpack.c.l.bf16 %v54
  %v410 = vunpack.c.l.bf16 %v55
  %v411 = vunpack.c.l.bf16 %v56
  %v412 = vunpack.c.l.bf16 %v57
  %v413 = vunpack.c.l.bf16 %v58
  %430 = vrot.lane.b32.xlu0 %v398, 32
  %v431 = vpop.permute.xlu0 %430
  %432 = vrot.lane.b32.xlu0 %v399, 32
  %v433 = vpop.permute.xlu0 %432
  %434 = vrot.lane.b32.xlu0 %v400, 32
  %v435 = vpop.permute.xlu0 %434
  %436 = vrot.lane.b32.xlu0 %v401, 32
  %v437 = vpop.permute.xlu0 %436
  %438 = vrot.lane.b32.xlu0 %v402, 32
  %v439 = vpop.permute.xlu0 %438
  %440 = vrot.lane.b32.xlu0 %v403, 32
  %v441 = vpop.permute.xlu0 %440
  %442 = vrot.lane.b32.xlu0 %v404, 32
  %v443 = vpop.permute.xlu0 %442
  %444 = vrot.lane.b32.xlu0 %v405, 32
  %v445 = vpop.permute.xlu0 %444
  %446 = vrot.lane.b32.xlu0 %v406, 32
  %v447 = vpop.permute.xlu0 %446
  %448 = vrot.lane.b32.xlu0 %v407, 32
  %v449 = vpop.permute.xlu0 %448
  %450 = vrot.lane.b32.xlu0 %v408, 32
  %v451 = vpop.permute.xlu0 %450
  %452 = vrot.lane.b32.xlu0 %v409, 32
  %v453 = vpop.permute.xlu0 %452
  %454 = vrot.lane.b32.xlu0 %v410, 32
  %v455 = vpop.permute.xlu0 %454
  %456 = vrot.lane.b32.xlu0 %v411, 32
  %v457 = vpop.permute.xlu0 %456
  %458 = vrot.lane.b32.xlu0 %v412, 32
  %v459 = vpop.permute.xlu0 %458
  %460 = vrot.lane.b32.xlu0 %v413, 32
  %v461 = vpop.permute.xlu0 %460
  %v478 = vsel %vm147, %v398, %v431
  %v479 = vsel %vm147, %v399, %v433
  %v480 = vsel %vm147, %v400, %v435
  %v481 = vsel %vm147, %v401, %v437
  %v482 = vsel %vm147, %v402, %v439
  %v483 = vsel %vm147, %v403, %v441
  %v484 = vsel %vm147, %v404, %v443
  %v485 = vsel %vm147, %v405, %v445
  %v486 = vsel %vm147, %v406, %v447
  %v487 = vsel %vm147, %v407, %v449
  %v488 = vsel %vm147, %v408, %v451
  %v489 = vsel %vm147, %v409, %v453
  %v490 = vsel %vm147, %v410, %v455
  %v491 = vsel %vm147, %v411, %v457
  %v492 = vsel %vm147, %v412, %v459
  %v493 = vsel %vm147, %v413, %v461
  %510 = vrot.lane.b32.xlu0 %v478, 64
  %v511 = vpop.permute.xlu0 %510
  %512 = vrot.lane.b32.xlu0 %v479, 64
  %v513 = vpop.permute.xlu0 %512
  %514 = vrot.lane.b32.xlu0 %v480, 64
  %v515 = vpop.permute.xlu0 %514
  %516 = vrot.lane.b32.xlu0 %v481, 64
  %v517 = vpop.permute.xlu0 %516
  %518 = vrot.lane.b32.xlu0 %v482, 64
  %v519 = vpop.permute.xlu0 %518
  %520 = vrot.lane.b32.xlu0 %v483, 64
  %v521 = vpop.permute.xlu0 %520
  %522 = vrot.lane.b32.xlu0 %v484, 64
  %v523 = vpop.permute.xlu0 %522
  %524 = vrot.lane.b32.xlu0 %v485, 64
  %v525 = vpop.permute.xlu0 %524
  %526 = vrot.lane.b32.xlu0 %v486, 64
  %v527 = vpop.permute.xlu0 %526
  %528 = vrot.lane.b32.xlu0 %v487, 64
  %v529 = vpop.permute.xlu0 %528
  %530 = vrot.lane.b32.xlu0 %v488, 64
  %v531 = vpop.permute.xlu0 %530
  %532 = vrot.lane.b32.xlu0 %v489, 64
  %v533 = vpop.permute.xlu0 %532
  %534 = vrot.lane.b32.xlu0 %v490, 64
  %v535 = vpop.permute.xlu0 %534
  %536 = vrot.lane.b32.xlu0 %v491, 64
  %v537 = vpop.permute.xlu0 %536
  %538 = vrot.lane.b32.xlu0 %v492, 64
  %v539 = vpop.permute.xlu0 %538
  %540 = vrot.lane.b32.xlu0 %v493, 64
  %v541 = vpop.permute.xlu0 %540
  %vm558 = vcmask 523264
  %v559 = vsel %vm558, %v478, %v511
  %v560 = vsel %vm558, %v479, %v513
  %v561 = vsel %vm558, %v480, %v515
  %v562 = vsel %vm558, %v481, %v517
  %v563 = vsel %vm558, %v482, %v519
  %v564 = vsel %vm558, %v483, %v521
  %v565 = vsel %vm558, %v484, %v523
  %v566 = vsel %vm558, %v485, %v525
  %v567 = vsel %vm558, %v486, %v527
  %v568 = vsel %vm558, %v487, %v529
  %v569 = vsel %vm558, %v488, %v531
  %v570 = vsel %vm558, %v489, %v533
  %v571 = vsel %vm558, %v490, %v535
  %v572 = vsel %vm558, %v491, %v537
  %v573 = vsel %vm558, %v492, %v539
  %v574 = vsel %vm558, %v493, %v541
  %v575 = vmul.f32 %v207, %v559
  %v576 = vmul.f32 %v209, %v559
  %v577 = vmul.f32 %v320, %v559
  %v578 = vmul.f32 %v322, %v559
  %v579 = vmul.f32 %v211, %v560
  %v580 = vmul.f32 %v213, %v560
  %v581 = vmul.f32 %v324, %v560
  %v582 = vmul.f32 %v326, %v560
  %v583 = vmul.f32 %v217, %v561
  %v584 = vmul.f32 %v219, %v561
  %v585 = vmul.f32 %v330, %v561
  %v586 = vmul.f32 %v332, %v561
  %v587 = vmul.f32 %v221, %v562
  %v588 = vmul.f32 %v223, %v562
  %v589 = vmul.f32 %v334, %v562
  %v590 = vmul.f32 %v336, %v562
  %v591 = vmul.f32 %v227, %v563
  %v592 = vmul.f32 %v229, %v563
  %v593 = vmul.f32 %v340, %v563
  %v594 = vmul.f32 %v342, %v563
  %v595 = vmul.f32 %v231, %v564
  %v596 = vmul.f32 %v233, %v564
  %v597 = vmul.f32 %v344, %v564
  %v598 = vmul.f32 %v346, %v564
  %v599 = vmul.f32 %v237, %v565
  %v600 = vmul.f32 %v239, %v565
  %v601 = vmul.f32 %v350, %v565
  %v602 = vmul.f32 %v352, %v565
  %v603 = vmul.f32 %v241, %v566
  %v604 = vmul.f32 %v243, %v566
  %v605 = vmul.f32 %v354, %v566
  %v606 = vmul.f32 %v356, %v566
  %v607 = vmul.f32 %v247, %v567
  %v608 = vmul.f32 %v249, %v567
  %v609 = vmul.f32 %v360, %v567
  %v610 = vmul.f32 %v362, %v567
  %v611 = vmul.f32 %v251, %v568
  %v612 = vmul.f32 %v253, %v568
  %v613 = vmul.f32 %v364, %v568
  %v614 = vmul.f32 %v366, %v568
  %v615 = vmul.f32 %v257, %v569
  %v616 = vmul.f32 %v259, %v569
  %v617 = vmul.f32 %v370, %v569
  %v618 = vmul.f32 %v372, %v569
  %v619 = vmul.f32 %v261, %v570
  %v620 = vmul.f32 %v263, %v570
  %v621 = vmul.f32 %v374, %v570
  %v622 = vmul.f32 %v376, %v570
  %v623 = vmul.f32 %v267, %v571
  %v624 = vmul.f32 %v269, %v571
  %v625 = vmul.f32 %v380, %v571
  %v626 = vmul.f32 %v382, %v571
  %v627 = vmul.f32 %v271, %v572
  %v628 = vmul.f32 %v273, %v572
  %v629 = vmul.f32 %v384, %v572
  %v630 = vmul.f32 %v386, %v572
  %v631 = vmul.f32 %v277, %v573
  %v632 = vmul.f32 %v279, %v573
  %v633 = vmul.f32 %v390, %v573
  %v634 = vmul.f32 %v392, %v573
  %v635 = vmul.f32 %v281, %v574
  %v636 = vmul.f32 %v283, %v574
  %v637 = vmul.f32 %v394, %v574
  %v638 = vmul.f32 %v396, %v574
  %v639 = vld [vmem:[%s6] sm:$0xff]
  %v640 = vld [vmem:[%s6 + $0x8] sm:$0xff]
  %v641 = vld [vmem:[%s6 + $0x10] sm:$0xff]
  %v642 = vld [vmem:[%s6 + $0x18] sm:$0xff]
  %v643 = vld [vmem:[%s6 + $0x20] sm:$0xff]
  %v644 = vld [vmem:[%s6 + $0x28] sm:$0xff]
  %v645 = vld [vmem:[%s6 + $0x30] sm:$0xff]
  %v646 = vld [vmem:[%s6 + $0x38] sm:$0xff]
  %v647 = vld [vmem:[%s6 + $0x40] sm:$0xff]
  %v648 = vld [vmem:[%s6 + $0x48] sm:$0xff]
  %v649 = vld [vmem:[%s6 + $0x50] sm:$0xff]
  %v650 = vld [vmem:[%s6 + $0x58] sm:$0xff]
  %v651 = vld [vmem:[%s6 + $0x60] sm:$0xff]
  %v652 = vld [vmem:[%s6 + $0x68] sm:$0xff]
  %v653 = vld [vmem:[%s6 + $0x70] sm:$0xff]
  %v654 = vld [vmem:[%s6 + $0x78] sm:$0xff]
  %v655 = vld [vmem:[%s6 + $0x80] sm:$0xff]
  %v656 = vld [vmem:[%s6 + $0x88] sm:$0xff]
  %v657 = vld [vmem:[%s6 + $0x90] sm:$0xff]
  %v658 = vld [vmem:[%s6 + $0x98] sm:$0xff]
  %v659 = vld [vmem:[%s6 + $0xa0] sm:$0xff]
  %v660 = vld [vmem:[%s6 + $0xa8] sm:$0xff]
  %v661 = vld [vmem:[%s6 + $0xb0] sm:$0xff]
  %v662 = vld [vmem:[%s6 + $0xb8] sm:$0xff]
  %v663 = vld [vmem:[%s6 + $0xc0] sm:$0xff]
  %v664 = vld [vmem:[%s6 + $0xc8] sm:$0xff]
  %v665 = vld [vmem:[%s6 + $0xd0] sm:$0xff]
  %v666 = vld [vmem:[%s6 + $0xd8] sm:$0xff]
  %v667 = vld [vmem:[%s6 + $0xe0] sm:$0xff]
  %v668 = vld [vmem:[%s6 + $0xe8] sm:$0xff]
  %v669 = vld [vmem:[%s6 + $0xf0] sm:$0xff]
  %v670 = vld [vmem:[%s6 + $0xf8] sm:$0xff]
  %v671 = vld [vmem:[%s6 + $0x100] sm:$0xff]
  %v672 = vld [vmem:[%s6 + $0x108] sm:$0xff]
  %v673 = vld [vmem:[%s6 + $0x110] sm:$0xff]
  %v674 = vld [vmem:[%s6 + $0x118] sm:$0xff]
  %v675 = vld [vmem:[%s6 + $0x120] sm:$0xff]
  %v676 = vld [vmem:[%s6 + $0x128] sm:$0xff]
  %v677 = vld [vmem:[%s6 + $0x130] sm:$0xff]
  %v678 = vld [vmem:[%s6 + $0x138] sm:$0xff]
  %v679 = vld [vmem:[%s6 + $0x140] sm:$0xff]
  %v680 = vld [vmem:[%s6 + $0x148] sm:$0xff]
  %v681 = vld [vmem:[%s6 + $0x150] sm:$0xff]
  %v682 = vld [vmem:[%s6 + $0x158] sm:$0xff]
  %v683 = vld [vmem:[%s6 + $0x160] sm:$0xff]
  %v684 = vld [vmem:[%s6 + $0x168] sm:$0xff]
  %v685 = vld [vmem:[%s6 + $0x170] sm:$0xff]
  %v686 = vld [vmem:[%s6 + $0x178] sm:$0xff]
  %v687 = vld [vmem:[%s6 + $0x180] sm:$0xff]
  %v688 = vld [vmem:[%s6 + $0x188] sm:$0xff]
  %v689 = vld [vmem:[%s6 + $0x190] sm:$0xff]
  %v690 = vld [vmem:[%s6 + $0x198] sm:$0xff]
  %v691 = vld [vmem:[%s6 + $0x1a0] sm:$0xff]
  %v692 = vld [vmem:[%s6 + $0x1a8] sm:$0xff]
  %v693 = vld [vmem:[%s6 + $0x1b0] sm:$0xff]
  %v694 = vld [vmem:[%s6 + $0x1b8] sm:$0xff]
  %v695 = vld [vmem:[%s6 + $0x1c0] sm:$0xff]
  %v696 = vld [vmem:[%s6 + $0x1c8] sm:$0xff]
  %v697 = vld [vmem:[%s6 + $0x1d0] sm:$0xff]
  %v698 = vld [vmem:[%s6 + $0x1d8] sm:$0xff]
  %v699 = vld [vmem:[%s6 + $0x1e0] sm:$0xff]
  %v700 = vld [vmem:[%s6 + $0x1e8] sm:$0xff]
  %v701 = vld [vmem:[%s6 + $0x1f0] sm:$0xff]
  %v702 = vld [vmem:[%s6 + $0x1f8] sm:$0xff]
  %v703 = vld [vmem:[%s3] sm:$0xf]
  %v704 = vld [vmem:[%s3 + $0x4] sm:$0xf]
  %v705 = vld [vmem:[%s3 + $0x8] sm:$0xf]
  %v706 = vld [vmem:[%s3 + $0xc] sm:$0xf]
  %v707 = vld [vmem:[%s4] sm:$0xf]
  %v708 = vld [vmem:[%s4 + $0x4] sm:$0xf]
  %v709 = vld [vmem:[%s4 + $0x8] sm:$0xf]
  %v710 = vld [vmem:[%s4 + $0xc] sm:$0xf]
  %v727 = vunpack.c.l.b16 %v43
  %v728 = vunpack.c.l.b16 %v44
  %v729 = vunpack.c.l.b16 %v45
  %v730 = vunpack.c.l.b16 %v46
  %v731 = vunpack.c.l.b16 %v47
  %v732 = vunpack.c.l.b16 %v48
  %v733 = vunpack.c.l.b16 %v49
  %v734 = vunpack.c.l.b16 %v50
  %v735 = vunpack.c.l.b16 %v51
  %v736 = vunpack.c.l.b16 %v52
  %v737 = vunpack.c.l.b16 %v53
  %v738 = vunpack.c.l.b16 %v54
  %v739 = vunpack.c.l.b16 %v55
  %v740 = vunpack.c.l.b16 %v56
  %v741 = vunpack.c.l.b16 %v57
  %v742 = vunpack.c.l.b16 %v58
  %v743 = vpack.c.b16 %v728, %v727
  %v744 = vpack.c.b16 %v730, %v729
  %v745 = vpack.c.b16 %v732, %v731
  %v746 = vpack.c.b16 %v734, %v733
  %v747 = vpack.c.b16 %v736, %v735
  %v748 = vpack.c.b16 %v738, %v737
  %v749 = vpack.c.b16 %v740, %v739
  %v750 = vpack.c.b16 %v742, %v741
  %v755 = vunpack.c.l.b16 %v707
  %v756 = vunpack.c.l.b16 %v708
  %v757 = vunpack.c.l.b16 %v709
  %v758 = vunpack.c.l.b16 %v710
  %v759 = vpack.c.b16 %v756, %v755
  %v760 = vpack.c.b16 %v758, %v757
  %v764 = vsel %vm147, %v743, 0
  %v767 = vsel %vm147, %v744, 0
  %v770 = vsel %vm147, %v745, 0
  %v773 = vsel %vm147, %v746, 0
  %v776 = vsel %vm147, %v747, 0
  %v779 = vsel %vm147, %v748, 0
  %v782 = vsel %vm147, %v749, 0
  %v785 = vsel %vm147, %v750, 0
  %787 = vmatprep.subr.bf16.mxu0 0
  %788 = vmatpush1.bf16.msra.mxu0 %v759
  %789 = vmatprep.subr.bf16.mxu0 0
  %790 = vmatpush1.bf16.msra.mxu0 %v760
  %791 = vmatprep.subr.bf16.mxu0 0
  %792 = vmatpush1.bf16.msra.mxu0 0
  %793 = vmatprep.subr.bf16.mxu0 0
  %794 = vmatpush1.bf16.msra.mxu0 0
  %795 = vmatprep.subr.bf16.mxu0 0
  %796 = vmatpush1.bf16.msra.mxu0 0
  %797 = vmatprep.subr.bf16.mxu0 0
  %798 = vmatpush1.bf16.msra.mxu0 0
  %799 = vmatprep.subr.bf16.mxu0 0
  %800 = vmatpush1.bf16.msra.mxu0 0
  %801 = vmatprep.subr.bf16.mxu0 0
  %802 = vmatpush1.bf16.msra.mxu0 0
  %803 = vmatprep.subr.bf16.mxu0 0
  %804 = vmatpush1.bf16.msra.mxu0 0
  %805 = vmatprep.subr.bf16.mxu0 0
  %806 = vmatpush1.bf16.msra.mxu0 0
  %807 = vmatprep.subr.bf16.mxu0 0
  %808 = vmatpush1.bf16.msra.mxu0 0
  %809 = vmatprep.subr.bf16.mxu0 0
  %810 = vmatpush1.bf16.msra.mxu0 0
  %811 = vmatprep.subr.bf16.mxu0 0
  %812 = vmatpush1.bf16.msra.mxu0 0
  %813 = vmatprep.subr.bf16.mxu0 0
  %814 = vmatpush1.bf16.msra.mxu0 0
  %815 = vmatprep.subr.bf16.mxu0 0
  %816 = vmatpush1.bf16.msra.mxu0 0
  %817 = vmatprep.subr.bf16.mxu0 0
  %818 = vmatpush1.bf16.msra.mxu0 0
  %819 = vmatprep.mubr.bf16.mxu0 0
  %820 = vmatmul.mubr.bf16.gmra.mrb[0].mxu0 %v764
  %v821 = vpop.f32.mrb[0].mxu0
  %v822 = vadd.f32 0.0, %v821
  %v823 = vpop.f32.mrb[0].mxu0
  %v824 = vpop.f32.mrb[0].mxu0
  %v825 = vadd.f32 0.0, %v824
  %v826 = vpop.f32.mrb[0].mxu0
  %827 = vmatprep.mubr.bf16.mxu0 0
  %828 = vmatmul.mubr.bf16.gmra.mrb[0].mxu0 %v767
  %v829 = vpop.f32.mrb[0].mxu0
  %v830 = vadd.f32 0.0, %v829
  %v831 = vpop.f32.mrb[0].mxu0
  %v832 = vpop.f32.mrb[0].mxu0
  %v833 = vadd.f32 0.0, %v832
  %v834 = vpop.f32.mrb[0].mxu0
  %835 = vmatprep.mubr.bf16.mxu0 0
  %836 = vmatmul.mubr.bf16.gmra.mrb[0].mxu0 %v770
  %v837 = vpop.f32.mrb[0].mxu0
  %v838 = vadd.f32 0.0, %v837
  %v839 = vpop.f32.mrb[0].mxu0
  %v840 = vpop.f32.mrb[0].mxu0
  %v841 = vadd.f32 0.0, %v840
  %v842 = vpop.f32.mrb[0].mxu0
  %843 = vmatprep.mubr.bf16.mxu0 0
  %844 = vmatmul.mubr.bf16.gmra.mrb[0].mxu0 %v773
  %v845 = vpop.f32.mrb[0].mxu0
  %v846 = vadd.f32 0.0, %v845
  %v847 = vpop.f32.mrb[0].mxu0
  %v848 = vpop.f32.mrb[0].mxu0
  %v849 = vadd.f32 0.0, %v848
  %v850 = vpop.f32.mrb[0].mxu0
  %851 = vmatprep.mubr.bf16.mxu0 0
  %852 = vmatmul.mubr.bf16.gmra.mrb[0].mxu0 %v776
  %v853 = vpop.f32.mrb[0].mxu0
  %v854 = vadd.f32 0.0, %v853
  %v855 = vpop.f32.mrb[0].mxu0
  %v856 = vpop.f32.mrb[0].mxu0
  %v857 = vadd.f32 0.0, %v856
  %v858 = vpop.f32.mrb[0].mxu0
  %859 = vmatprep.mubr.bf16.mxu0 0
  %860 = vmatmul.mubr.bf16.gmra.mrb[0].mxu0 %v779
  %v861 = vpop.f32.mrb[0].mxu0
  %v862 = vadd.f32 0.0, %v861
  %v863 = vpop.f32.mrb[0].mxu0
  %v864 = vpop.f32.mrb[0].mxu0
  %v865 = vadd.f32 0.0, %v864
  %v866 = vpop.f32.mrb[0].mxu0
  %867 = vmatprep.mubr.bf16.mxu0 0
  %868 = vmatmul.mubr.bf16.gmra.mrb[0].mxu0 %v782
  %v869 = vpop.f32.mrb[0].mxu0
  %v870 = vadd.f32 0.0, %v869
  %v871 = vpop.f32.mrb[0].mxu0
  %v872 = vpop.f32.mrb[0].mxu0
  %v873 = vadd.f32 0.0, %v872
  %v874 = vpop.f32.mrb[0].mxu0
  %875 = vmatprep.mubr.bf16.mxu0 0
  %876 = vmatmul.mubr.bf16.gmra.mrb[0].mxu0 %v785
  %v877 = vpop.f32.mrb[0].mxu0
  %v878 = vadd.f32 0.0, %v877
  %v879 = vpop.f32.mrb[0].mxu0
  %v880 = vpop.f32.mrb[0].mxu0
  %v881 = vadd.f32 0.0, %v880
  %v882 = vpop.f32.mrb[0].mxu0
  %883 = vdwg.mxu0
  %v888 = vunpack.c.l.b16 %v703
  %v889 = vunpack.c.l.b16 %v704
  %v890 = vunpack.c.l.b16 %v705
  %v891 = vunpack.c.l.b16 %v706
  %v892 = vpack.c.b16 %v889, %v888
  %v893 = vpack.c.b16 %v891, %v890
  %896 = vmatprep.subr.bf16.mxu0 0
  %897 = vmatpush1.bf16.msra.mxu0 %v892
  %898 = vmatprep.subr.bf16.mxu0 0
  %899 = vmatpush1.bf16.msra.mxu0 %v893
  %900 = vmatprep.subr.bf16.mxu0 0
  %901 = vmatpush1.bf16.msra.mxu0 0
  %902 = vmatprep.subr.bf16.mxu0 0
  %903 = vmatpush1.bf16.msra.mxu0 0
  %904 = vmatprep.subr.bf16.mxu0 0
  %905 = vmatpush1.bf16.msra.mxu0 0
  %906 = vmatprep.subr.bf16.mxu0 0
  %907 = vmatpush1.bf16.msra.mxu0 0
  %908 = vmatprep.subr.bf16.mxu0 0
  %909 = vmatpush1.bf16.msra.mxu0 0
  %910 = vmatprep.subr.bf16.mxu0 0
  %911 = vmatpush1.bf16.msra.mxu0 0
  %912 = vmatprep.subr.bf16.mxu0 0
  %913 = vmatpush1.bf16.msra.mxu0 0
  %914 = vmatprep.subr.bf16.mxu0 0
  %915 = vmatpush1.bf16.msra.mxu0 0
  %916 = vmatprep.subr.bf16.mxu0 0
  %917 = vmatpush1.bf16.msra.mxu0 0
  %918 = vmatprep.subr.bf16.mxu0 0
  %919 = vmatpush1.bf16.msra.mxu0 0
  %920 = vmatprep.subr.bf16.mxu0 0
  %921 = vmatpush1.bf16.msra.mxu0 0
  %922 = vmatprep.subr.bf16.mxu0 0
  %923 = vmatpush1.bf16.msra.mxu0 0
  %924 = vmatprep.subr.bf16.mxu0 0
  %925 = vmatpush1.bf16.msra.mxu0 0
  %926 = vmatprep.subr.bf16.mxu0 0
  %927 = vmatpush1.bf16.msra.mxu0 0
  %928 = vmatprep.mubr.bf16.mxu0 0
  %929 = vmatmul.mubr.bf16.gmra.mrb[0].mxu0 %v149
  %v930 = vpop.f32.mrb[0].mxu0
  %v931 = vadd.f32 %v822, %v930
  %v932 = vpop.f32.mrb[0].mxu0
  %v933 = vpop.f32.mrb[0].mxu0
  %v934 = vadd.f32 %v825, %v933
  %v935 = vpop.f32.mrb[0].mxu0
  %936 = vmatprep.mubr.bf16.mxu0 0
  %937 = vmatmul.mubr.bf16.gmra.mrb[0].mxu0 %v152
  %v938 = vpop.f32.mrb[0].mxu0
  %v939 = vadd.f32 %v830, %v938
  %v940 = vpop.f32.mrb[0].mxu0
  %v941 = vpop.f32.mrb[0].mxu0
  %v942 = vadd.f32 %v833, %v941
  %v943 = vpop.f32.mrb[0].mxu0
  %944 = vmatprep.mubr.bf16.mxu0 0
  %945 = vmatmul.mubr.bf16.gmra.mrb[0].mxu0 %v155
  %v946 = vpop.f32.mrb[0].mxu0
  %v947 = vadd.f32 %v838, %v946
  %v948 = vpop.f32.mrb[0].mxu0
  %v949 = vpop.f32.mrb[0].mxu0
  %v950 = vadd.f32 %v841, %v949
  %v951 = vpop.f32.mrb[0].mxu0
  %952 = vmatprep.mubr.bf16.mxu0 0
  %953 = vmatmul.mubr.bf16.gmra.mrb[0].mxu0 %v158
  %v954 = vpop.f32.mrb[0].mxu0
  %v955 = vadd.f32 %v846, %v954
  %v956 = vpop.f32.mrb[0].mxu0
  %v957 = vpop.f32.mrb[0].mxu0
  %v958 = vadd.f32 %v849, %v957
  %v959 = vpop.f32.mrb[0].mxu0
  %960 = vmatprep.mubr.bf16.mxu0 0
  %961 = vmatmul.mubr.bf16.gmra.mrb[0].mxu0 %v161
  %v962 = vpop.f32.mrb[0].mxu0
  %v963 = vadd.f32 %v854, %v962
  %v964 = vpop.f32.mrb[0].mxu0
  %v965 = vpop.f32.mrb[0].mxu0
  %v966 = vadd.f32 %v857, %v965
  %v967 = vpop.f32.mrb[0].mxu0
  %968 = vmatprep.mubr.bf16.mxu0 0
  %969 = vmatmul.mubr.bf16.gmra.mrb[0].mxu0 %v164
  %v970 = vpop.f32.mrb[0].mxu0
  %v971 = vadd.f32 %v862, %v970
  %v972 = vpop.f32.mrb[0].mxu0
  %v973 = vpop.f32.mrb[0].mxu0
  %v974 = vadd.f32 %v865, %v973
  %v975 = vpop.f32.mrb[0].mxu0
  %976 = vmatprep.mubr.bf16.mxu0 0
  %977 = vmatmul.mubr.bf16.gmra.mrb[0].mxu0 %v167
  %v978 = vpop.f32.mrb[0].mxu0
  %v979 = vadd.f32 %v870, %v978
  %v980 = vpop.f32.mrb[0].mxu0
  %v981 = vpop.f32.mrb[0].mxu0
  %v982 = vadd.f32 %v873, %v981
  %v983 = vpop.f32.mrb[0].mxu0
  %984 = vmatprep.mubr.bf16.mxu0 0
  %985 = vmatmul.mubr.bf16.gmra.mrb[0].mxu0 %v170
  %v986 = vpop.f32.mrb[0].mxu0
  %v987 = vadd.f32 %v878, %v986
  %v988 = vpop.f32.mrb[0].mxu0
  %v989 = vpop.f32.mrb[0].mxu0
  %v990 = vadd.f32 %v881, %v989
  %v991 = vpop.f32.mrb[0].mxu0
  %992 = vdwg.mxu0
  %993 = vmatprep.subr.mxu0 0.0
  %994 = vmatpush1.msra.mxu0 %v639
  %995 = vmatprep.subr.mxu0 0.0
  %996 = vmatpush1.msra.mxu0 %v640
  %997 = vmatprep.subr.mxu0 0.0
  %998 = vmatpush1.msra.mxu0 %v641
  %999 = vmatprep.subr.mxu0 0.0
  %1000 = vmatpush1.msra.mxu0 %v642
  %1001 = vmatprep.subr.mxu0 0.0
  %1002 = vmatpush1.msra.mxu0 %v643
  %1003 = vmatprep.subr.mxu0 0.0
  %1004 = vmatpush1.msra.mxu0 %v644
  %1005 = vmatprep.subr.mxu0 0.0
  %1006 = vmatpush1.msra.mxu0 %v645
  %1007 = vmatprep.subr.mxu0 0.0
  %1008 = vmatpush1.msra.mxu0 %v646
  %1009 = vmatprep.subr.mxu0 0.0
  %1010 = vmatpush1.msra.mxu0 %v647
  %1011 = vmatprep.subr.mxu0 0.0
  %1012 = vmatpush1.msra.mxu0 %v648
  %1013 = vmatprep.subr.mxu0 0.0
  %1014 = vmatpush1.msra.mxu0 %v649
  %1015 = vmatprep.subr.mxu0 0.0
  %1016 = vmatpush1.msra.mxu0 %v650
  %1017 = vmatprep.subr.mxu0 0.0
  %1018 = vmatpush1.msra.mxu0 %v651
  %1019 = vmatprep.subr.mxu0 0.0
  %1020 = vmatpush1.msra.mxu0 %v652
  %1021 = vmatprep.subr.mxu0 0.0
  %1022 = vmatpush1.msra.mxu0 %v653
  %1023 = vmatprep.subr.mxu0 0.0
  %1024 = vmatpush1.msra.mxu0 %v654
  %1025 = vmatprep.subr.mxu0 0.0
  %1026 = vmatpush1.msra.mxu0 %v655
  %1027 = vmatprep.subr.mxu0 0.0
  %1028 = vmatpush1.msra.mxu0 %v656
  %1029 = vmatprep.subr.mxu0 0.0
  %1030 = vmatpush1.msra.mxu0 %v657
  %1031 = vmatprep.subr.mxu0 0.0
  %1032 = vmatpush1.msra.mxu0 %v658
  %1033 = vmatprep.subr.mxu0 0.0
  %1034 = vmatpush1.msra.mxu0 %v659
  %1035 = vmatprep.subr.mxu0 0.0
  %1036 = vmatpush1.msra.mxu0 %v660
  %1037 = vmatprep.subr.mxu0 0.0
  %1038 = vmatpush1.msra.mxu0 %v661
  %1039 = vmatprep.subr.mxu0 0.0
  %1040 = vmatpush1.msra.mxu0 %v662
  %1041 = vmatprep.subr.mxu0 0.0
  %1042 = vmatpush1.msra.mxu0 %v663
  %1043 = vmatprep.subr.mxu0 0.0
  %1044 = vmatpush1.msra.mxu0 %v664
  %1045 = vmatprep.subr.mxu0 0.0
  %1046 = vmatpush1.msra.mxu0 %v665
  %1047 = vmatprep.subr.mxu0 0.0
  %1048 = vmatpush1.msra.mxu0 %v666
  %1049 = vmatprep.subr.mxu0 0.0
  %1050 = vmatpush1.msra.mxu0 %v667
  %1051 = vmatprep.subr.mxu0 0.0
  %1052 = vmatpush1.msra.mxu0 %v668
  %1053 = vmatprep.subr.mxu0 0.0
  %1054 = vmatpush1.msra.mxu0 %v669
  %1055 = vmatprep.subr.mxu0 0.0
  %1056 = vmatpush1.msra.mxu0 %v670
  %1057 = vmatprep.mubr.f32.mxu0 %v576
  %1058 = vmatmul.mubr.f32.gmra.mrb[0].mxu0 %v575
  %v1059 = vpop.f32.mrb[0].mxu0
  %v1060 = vadd.f32 %v931, %v1059
  %v1061 = vpop.f32.mrb[0].mxu0
  %1062 = vmatprep.mubr.f32.mxu0 %v580
  %1063 = vmatmul.mubr.f32.gmra.mrb[0].mxu0 %v579
  %v1064 = vpop.f32.mrb[0].mxu0
  %v1065 = vadd.f32 %v934, %v1064
  %v1066 = vpop.f32.mrb[0].mxu0
  %1067 = vmatprep.mubr.f32.mxu0 %v584
  %1068 = vmatmul.mubr.f32.gmra.mrb[0].mxu0 %v583
  %v1069 = vpop.f32.mrb[0].mxu0
  %v1070 = vadd.f32 %v939, %v1069
  %v1071 = vpop.f32.mrb[0].mxu0
  %1072 = vmatprep.mubr.f32.mxu0 %v588
  %1073 = vmatmul.mubr.f32.gmra.mrb[0].mxu0 %v587
  %v1074 = vpop.f32.mrb[0].mxu0
  %v1075 = vadd.f32 %v942, %v1074
  %v1076 = vpop.f32.mrb[0].mxu0
  %1077 = vmatprep.mubr.f32.mxu0 %v592
  %1078 = vmatmul.mubr.f32.gmra.mrb[0].mxu0 %v591
  %v1079 = vpop.f32.mrb[0].mxu0
  %v1080 = vadd.f32 %v947, %v1079
  %v1081 = vpop.f32.mrb[0].mxu0
  %1082 = vmatprep.mubr.f32.mxu0 %v596
  %1083 = vmatmul.mubr.f32.gmra.mrb[0].mxu0 %v595
  %v1084 = vpop.f32.mrb[0].mxu0
  %v1085 = vadd.f32 %v950, %v1084
  %v1086 = vpop.f32.mrb[0].mxu0
  %1087 = vmatprep.mubr.f32.mxu0 %v600
  %1088 = vmatmul.mubr.f32.gmra.mrb[0].mxu0 %v599
  %v1089 = vpop.f32.mrb[0].mxu0
  %v1090 = vadd.f32 %v955, %v1089
  %v1091 = vpop.f32.mrb[0].mxu0
  %1092 = vmatprep.mubr.f32.mxu0 %v604
  %1093 = vmatmul.mubr.f32.gmra.mrb[0].mxu0 %v603
  %v1094 = vpop.f32.mrb[0].mxu0
  %v1095 = vadd.f32 %v958, %v1094
  %v1096 = vpop.f32.mrb[0].mxu0
  %1097 = vmatprep.mubr.f32.mxu0 %v608
  %1098 = vmatmul.mubr.f32.gmra.mrb[0].mxu0 %v607
  %v1099 = vpop.f32.mrb[0].mxu0
  %v1100 = vadd.f32 %v963, %v1099
  %v1101 = vpop.f32.mrb[0].mxu0
  %1102 = vmatprep.mubr.f32.mxu0 %v612
  %1103 = vmatmul.mubr.f32.gmra.mrb[0].mxu0 %v611
  %v1104 = vpop.f32.mrb[0].mxu0
  %v1105 = vadd.f32 %v966, %v1104
  %v1106 = vpop.f32.mrb[0].mxu0
  %1107 = vmatprep.mubr.f32.mxu0 %v616
  %1108 = vmatmul.mubr.f32.gmra.mrb[0].mxu0 %v615
  %v1109 = vpop.f32.mrb[0].mxu0
  %v1110 = vadd.f32 %v971, %v1109
  %v1111 = vpop.f32.mrb[0].mxu0
  %1112 = vmatprep.mubr.f32.mxu0 %v620
  %1113 = vmatmul.mubr.f32.gmra.mrb[0].mxu0 %v619
  %v1114 = vpop.f32.mrb[0].mxu0
  %v1115 = vadd.f32 %v974, %v1114
  %v1116 = vpop.f32.mrb[0].mxu0
  %1117 = vmatprep.mubr.f32.mxu0 %v624
  %1118 = vmatmul.mubr.f32.gmra.mrb[0].mxu0 %v623
  %v1119 = vpop.f32.mrb[0].mxu0
  %v1120 = vadd.f32 %v979, %v1119
  %v1121 = vpop.f32.mrb[0].mxu0
  %1122 = vmatprep.mubr.f32.mxu0 %v628
  %1123 = vmatmul.mubr.f32.gmra.mrb[0].mxu0 %v627
  %v1124 = vpop.f32.mrb[0].mxu0
  %v1125 = vadd.f32 %v982, %v1124
  %v1126 = vpop.f32.mrb[0].mxu0
  %1127 = vmatprep.mubr.f32.mxu0 %v632
  %1128 = vmatmul.mubr.f32.gmra.mrb[0].mxu0 %v631
  %v1129 = vpop.f32.mrb[0].mxu0
  %v1130 = vadd.f32 %v987, %v1129
  %v1131 = vpop.f32.mrb[0].mxu0
  %1132 = vmatprep.mubr.f32.mxu0 %v636
  %1133 = vmatmul.mubr.f32.gmra.mrb[0].mxu0 %v635
  %v1134 = vpop.f32.mrb[0].mxu0
  %v1135 = vadd.f32 %v990, %v1134
  %v1136 = vpop.f32.mrb[0].mxu0
  %1137 = vdwg.mxu0
  %1138 = vmatprep.subr.mxu0 0.0
  %1139 = vmatpush1.msra.mxu0 %v671
  %1140 = vmatprep.subr.mxu0 0.0
  %1141 = vmatpush1.msra.mxu0 %v672
  %1142 = vmatprep.subr.mxu0 0.0
  %1143 = vmatpush1.msra.mxu0 %v673
  %1144 = vmatprep.subr.mxu0 0.0
  %1145 = vmatpush1.msra.mxu0 %v674
  %1146 = vmatprep.subr.mxu0 0.0
  %1147 = vmatpush1.msra.mxu0 %v675
  %1148 = vmatprep.subr.mxu0 0.0
  %1149 = vmatpush1.msra.mxu0 %v676
  %1150 = vmatprep.subr.mxu0 0.0
  %1151 = vmatpush1.msra.mxu0 %v677
  %1152 = vmatprep.subr.mxu0 0.0
  %1153 = vmatpush1.msra.mxu0 %v678
  %1154 = vmatprep.subr.mxu0 0.0
  %1155 = vmatpush1.msra.mxu0 %v679
  %1156 = vmatprep.subr.mxu0 0.0
  %1157 = vmatpush1.msra.mxu0 %v680
  %1158 = vmatprep.subr.mxu0 0.0
  %1159 = vmatpush1.msra.mxu0 %v681
  %1160 = vmatprep.subr.mxu0 0.0
  %1161 = vmatpush1.msra.mxu0 %v682
  %1162 = vmatprep.subr.mxu0 0.0
  %1163 = vmatpush1.msra.mxu0 %v683
  %1164 = vmatprep.subr.mxu0 0.0
  %1165 = vmatpush1.msra.mxu0 %v684
  %1166 = vmatprep.subr.mxu0 0.0
  %1167 = vmatpush1.msra.mxu0 %v685
  %1168 = vmatprep.subr.mxu0 0.0
  %1169 = vmatpush1.msra.mxu0 %v686
  %1170 = vmatprep.subr.mxu0 0.0
  %1171 = vmatpush1.msra.mxu0 %v687
  %1172 = vmatprep.subr.mxu0 0.0
  %1173 = vmatpush1.msra.mxu0 %v688
  %1174 = vmatprep.subr.mxu0 0.0
  %1175 = vmatpush1.msra.mxu0 %v689
  %1176 = vmatprep.subr.mxu0 0.0
  %1177 = vmatpush1.msra.mxu0 %v690
  %1178 = vmatprep.subr.mxu0 0.0
  %1179 = vmatpush1.msra.mxu0 %v691
  %1180 = vmatprep.subr.mxu0 0.0
  %1181 = vmatpush1.msra.mxu0 %v692
  %1182 = vmatprep.subr.mxu0 0.0
  %1183 = vmatpush1.msra.mxu0 %v693
  %1184 = vmatprep.subr.mxu0 0.0
  %1185 = vmatpush1.msra.mxu0 %v694
  %1186 = vmatprep.subr.mxu0 0.0
  %1187 = vmatpush1.msra.mxu0 %v695
  %1188 = vmatprep.subr.mxu0 0.0
  %1189 = vmatpush1.msra.mxu0 %v696
  %1190 = vmatprep.subr.mxu0 0.0
  %1191 = vmatpush1.msra.mxu0 %v697
  %1192 = vmatprep.subr.mxu0 0.0
  %1193 = vmatpush1.msra.mxu0 %v698
  %1194 = vmatprep.subr.mxu0 0.0
  %1195 = vmatpush1.msra.mxu0 %v699
  %1196 = vmatprep.subr.mxu0 0.0
  %1197 = vmatpush1.msra.mxu0 %v700
  %1198 = vmatprep.subr.mxu0 0.0
  %1199 = vmatpush1.msra.mxu0 %v701
  %1200 = vmatprep.subr.mxu0 0.0
  %1201 = vmatpush1.msra.mxu0 %v702
  %1202 = vmatprep.mubr.f32.mxu0 %v578
  %1203 = vmatmul.mubr.f32.gmra.mrb[0].mxu0 %v577
  %v1204 = vpop.f32.mrb[0].mxu0
  %v1205 = vadd.f32 %v1060, %v1204
  %v1206 = vpop.f32.mrb[0].mxu0
  %1207 = vmatprep.mubr.f32.mxu0 %v582
  %1208 = vmatmul.mubr.f32.gmra.mrb[0].mxu0 %v581
  %v1209 = vpop.f32.mrb[0].mxu0
  %v1210 = vadd.f32 %v1065, %v1209
  %v1211 = vpop.f32.mrb[0].mxu0
  %1212 = vmatprep.mubr.f32.mxu0 %v586
  %1213 = vmatmul.mubr.f32.gmra.mrb[0].mxu0 %v585
  %v1214 = vpop.f32.mrb[0].mxu0
  %v1215 = vadd.f32 %v1070, %v1214
  %v1216 = vpop.f32.mrb[0].mxu0
  %1217 = vmatprep.mubr.f32.mxu0 %v590
  %1218 = vmatmul.mubr.f32.gmra.mrb[0].mxu0 %v589
  %v1219 = vpop.f32.mrb[0].mxu0
  %v1220 = vadd.f32 %v1075, %v1219
  %v1221 = vpop.f32.mrb[0].mxu0
  %1222 = vmatprep.mubr.f32.mxu0 %v594
  %1223 = vmatmul.mubr.f32.gmra.mrb[0].mxu0 %v593
  %v1224 = vpop.f32.mrb[0].mxu0
  %v1225 = vadd.f32 %v1080, %v1224
  %v1226 = vpop.f32.mrb[0].mxu0
  %1227 = vmatprep.mubr.f32.mxu0 %v598
  %1228 = vmatmul.mubr.f32.gmra.mrb[0].mxu0 %v597
  %v1229 = vpop.f32.mrb[0].mxu0
  %v1230 = vadd.f32 %v1085, %v1229
  %v1231 = vpop.f32.mrb[0].mxu0
  %1232 = vmatprep.mubr.f32.mxu0 %v602
  %1233 = vmatmul.mubr.f32.gmra.mrb[0].mxu0 %v601
  %v1234 = vpop.f32.mrb[0].mxu0
  %v1235 = vadd.f32 %v1090, %v1234
  %v1236 = vpop.f32.mrb[0].mxu0
  %1237 = vmatprep.mubr.f32.mxu0 %v606
  %1238 = vmatmul.mubr.f32.gmra.mrb[0].mxu0 %v605
  %v1239 = vpop.f32.mrb[0].mxu0
  %v1240 = vadd.f32 %v1095, %v1239
  %v1241 = vpop.f32.mrb[0].mxu0
  %1242 = vmatprep.mubr.f32.mxu0 %v610
  %1243 = vmatmul.mubr.f32.gmra.mrb[0].mxu0 %v609
  %v1244 = vpop.f32.mrb[0].mxu0
  %v1245 = vadd.f32 %v1100, %v1244
  %v1246 = vpop.f32.mrb[0].mxu0
  %1247 = vmatprep.mubr.f32.mxu0 %v614
  %1248 = vmatmul.mubr.f32.gmra.mrb[0].mxu0 %v613
  %v1249 = vpop.f32.mrb[0].mxu0
  %v1250 = vadd.f32 %v1105, %v1249
  %v1251 = vpop.f32.mrb[0].mxu0
  %1252 = vmatprep.mubr.f32.mxu0 %v618
  %1253 = vmatmul.mubr.f32.gmra.mrb[0].mxu0 %v617
  %v1254 = vpop.f32.mrb[0].mxu0
  %v1255 = vadd.f32 %v1110, %v1254
  %v1256 = vpop.f32.mrb[0].mxu0
  %1257 = vmatprep.mubr.f32.mxu0 %v622
  %1258 = vmatmul.mubr.f32.gmra.mrb[0].mxu0 %v621
  %v1259 = vpop.f32.mrb[0].mxu0
  %v1260 = vadd.f32 %v1115, %v1259
  %v1261 = vpop.f32.mrb[0].mxu0
  %1262 = vmatprep.mubr.f32.mxu0 %v626
  %1263 = vmatmul.mubr.f32.gmra.mrb[0].mxu0 %v625
  %v1264 = vpop.f32.mrb[0].mxu0
  %v1265 = vadd.f32 %v1120, %v1264
  %v1266 = vpop.f32.mrb[0].mxu0
  %1267 = vmatprep.mubr.f32.mxu0 %v630
  %1268 = vmatmul.mubr.f32.gmra.mrb[0].mxu0 %v629
  %v1269 = vpop.f32.mrb[0].mxu0
  %v1270 = vadd.f32 %v1125, %v1269
  %v1271 = vpop.f32.mrb[0].mxu0
  %1272 = vmatprep.mubr.f32.mxu0 %v634
  %1273 = vmatmul.mubr.f32.gmra.mrb[0].mxu0 %v633
  %v1274 = vpop.f32.mrb[0].mxu0
  %v1275 = vadd.f32 %v1130, %v1274
  %v1276 = vpop.f32.mrb[0].mxu0
  %1277 = vmatprep.mubr.f32.mxu0 %v638
  %1278 = vmatmul.mubr.f32.gmra.mrb[0].mxu0 %v637
  %v1279 = vpop.f32.mrb[0].mxu0
  %v1280 = vadd.f32 %v1135, %v1279
  %v1281 = vpop.f32.mrb[0].mxu0
  %1282 = vdwg.mxu0
  %v1283 = vld [vmem:[%s5] sm:$0x1]
  %v1285 = vlaneseq
  %v1286 = vshrl.u32 %v1285, 7
  %v1287 = vsub.s32 0, %v1286
  %v1288 = vrot.slane %v1283, %v1287
  %v1290 = vadd.f32 %v1205, %v1288
  %v1291 = vadd.f32 %v1210, %v1288
  %v1292 = vadd.f32 %v1215, %v1288
  %v1293 = vadd.f32 %v1220, %v1288
  %v1294 = vadd.f32 %v1225, %v1288
  %v1295 = vadd.f32 %v1230, %v1288
  %v1296 = vadd.f32 %v1235, %v1288
  %v1297 = vadd.f32 %v1240, %v1288
  %v1298 = vadd.f32 %v1245, %v1288
  %v1299 = vadd.f32 %v1250, %v1288
  %v1300 = vadd.f32 %v1255, %v1288
  %v1301 = vadd.f32 %v1260, %v1288
  %v1302 = vadd.f32 %v1265, %v1288
  %v1303 = vadd.f32 %v1270, %v1288
  %v1304 = vadd.f32 %v1275, %v1288
  %v1305 = vadd.f32 %v1280, %v1288
  %v1306 = vmax.f32 %v1290, 0.0
  %v1307 = vmax.f32 %v1291, 0.0
  %v1308 = vmax.f32 %v1292, 0.0
  %v1309 = vmax.f32 %v1293, 0.0
  %v1310 = vmax.f32 %v1294, 0.0
  %v1311 = vmax.f32 %v1295, 0.0
  %v1312 = vmax.f32 %v1296, 0.0
  %v1313 = vmax.f32 %v1297, 0.0
  %v1314 = vmax.f32 %v1298, 0.0
  %v1315 = vmax.f32 %v1299, 0.0
  %v1316 = vmax.f32 %v1300, 0.0
  %v1317 = vmax.f32 %v1301, 0.0
  %v1318 = vmax.f32 %v1302, 0.0
  %v1319 = vmax.f32 %v1303, 0.0
  %v1320 = vmax.f32 %v1304, 0.0
  %v1321 = vmax.f32 %v1305, 0.0
  %1322 = vxpose.xlu0.b32.start [1/16] %v1306, 128
  %1323 = vxpose.xlu0.b32.cont [2/16] %v1307, 128
  %1324 = vxpose.xlu0.b32.cont [3/16] %v1308, 128
  %1325 = vxpose.xlu0.b32.cont [4/16] %v1309, 128
  %1326 = vxpose.xlu0.b32.cont [5/16] %v1310, 128
  %1327 = vxpose.xlu0.b32.cont [6/16] %v1311, 128
  %1328 = vxpose.xlu0.b32.cont [7/16] %v1312, 128
  %1329 = vxpose.xlu0.b32.cont [8/16] %v1313, 128
  %1330 = vxpose.xlu0.b32.cont [9/16] %v1314, 128
  %1331 = vxpose.xlu0.b32.cont [10/16] %v1315, 128
  %1332 = vxpose.xlu0.b32.cont [11/16] %v1316, 128
  %1333 = vxpose.xlu0.b32.cont [12/16] %v1317, 128
  %1334 = vxpose.xlu0.b32.cont [13/16] %v1318, 128
  %1335 = vxpose.xlu0.b32.cont [14/16] %v1319, 128
  %1336 = vxpose.xlu0.b32.cont [15/16] %v1320, 128
  %1337 = vxpose.xlu0.b32.end [16/16] %v1321, 128
  %v1338 = vpop.trf.xlu0
  %v1339 = vpop.trf.xlu0
  %v1340 = vpop.trf.xlu0
  %v1341 = vpop.trf.xlu0
  %v1342 = vpop.trf.xlu0
  %v1343 = vpop.trf.xlu0
  %v1344 = vpop.trf.xlu0
  %v1345 = vpop.trf.xlu0
  %v1346 = vpop.trf.xlu0
  %v1347 = vpop.trf.xlu0
  %v1348 = vpop.trf.xlu0
  %v1349 = vpop.trf.xlu0
  %v1350 = vpop.trf.xlu0
  %v1351 = vpop.trf.xlu0
  %v1352 = vpop.trf.xlu0
  %v1353 = vpop.trf.xlu0
  %1354 = vst [vmem:[%s7] sm:$0xff] %v1338
  %1355 = vst [vmem:[%s7 + $0x8] sm:$0xff] %v1339
  // Predicated region
  $region30: #{tensor_network_forward.1} parent=0 // pred_check
    _
  $region31: #{tensor_network_forward.1} parent=0 // pred_check_branch
    %1357 = sbr.rel (0) target = $region33
  $region32: #{tensor_network_forward.1} parent=0 // pred_region
    _
  $region33: #{tensor_network_forward.1} parent=0 // pred_fallthru
    _
  // Predicated region
  $region34: #{tensor_network_forward.1} parent=0 // pred_check
    _
  $region35: #{tensor_network_forward.1} parent=0 // pred_check_branch
    %1359 = sbr.rel (0) target = $region37
  $region36: #{tensor_network_forward.1} parent=0 // pred_region
    _
  $region37: #{tensor_network_forward.1} parent=0 // pred_fallthru
    _

</llo_original>
